<compile_context>
chip_gen: v7x
topology: tpu7x:2x2x1
jax: 0.10.0
libtpu: 0.0.40
codegen_flags: <defaults>
</compile_context>

<pallas_src>
import jax
import jax.numpy as jnp
from jax.experimental import pallas as pl
from jax.experimental.pallas import tpu as pltpu

OUT_PAD = 128  # lane-dense padded width for the fc output (sliced to 2 outside)


# ----------------------------------------------------------------------------
# Pallas kernel: one timestep's STGCN forward, everything VMEM-resident.
# ----------------------------------------------------------------------------
def stgcn_kernel(a_ref, x_ref, w1_ref, b1_ref, w2_ref, b2_ref,
                 wf_ref, bf_ref, o_ref):
    a = a_ref[...]                                    # [N, N]  bf16 (resident)
    x = x_ref[0]                                      # [N, Cin] bf16 (this step)

    # ---- GCNConv 1 (reassociated): relu((A_hat @ X) @ W1 + b1) ----
    ax = jnp.dot(a, x, preferred_element_type=jnp.float32)          # [N, Cin] f32
    h = jnp.dot(ax.astype(jnp.bfloat16), w1_ref[...],
                preferred_element_type=jnp.float32)                  # [N, H]  f32
    h = jnp.maximum(h + b1_ref[...], 0.0)                            # f32 VPU

    # ---- GCNConv 2: relu(A_hat @ (H @ W2) + b2) ----
    h = jnp.dot(h.astype(jnp.bfloat16), w2_ref[...],
                preferred_element_type=jnp.float32)                  # [N, Cout]
    h = jnp.dot(a, h.astype(jnp.bfloat16),
                preferred_element_type=jnp.float32)
    h = jnp.maximum(h + b2_ref[...], 0.0)

    # ---- fc: H @ Wfc_pad + bfc_pad  (lane-dense [N, 128] store) ----
    o_ref[0] = (jnp.dot(h.astype(jnp.bfloat16), wf_ref[...],
                        preferred_element_type=jnp.float32)
                + bf_ref[...])


def stgcn_forward(a_hat, x_seq, params):
    """x_seq: [T, N, Cin] node features for T timesteps sharing one graph."""
    w1, b1, w2, b2, wf, bf = params
    t_steps, n, cin = x_seq.shape
    hid = w1.shape[1]
    cout = w2.shape[1]

    # bf16 MXU operands; biases stay f32 (added onto the f32 accumulator).
    a_bf = a_hat.astype(jnp.bfloat16)
    x_bf = x_seq.astype(jnp.bfloat16)
    w1_bf = w1.astype(jnp.bfloat16)
    w2_bf = w2.astype(jnp.bfloat16)
    # Pad fc weight/bias to 128 output lanes -> unmasked lane-dense stores.
    wf_pad = jnp.zeros((cout, OUT_PAD), jnp.float32).at[:, :wf.shape[1]].set(wf)
    wf_pad = wf_pad.astype(jnp.bfloat16)
    bf_pad = jnp.zeros((1, OUT_PAD), jnp.float32).at[:, :bf.shape[1]].set(bf)

    flops = t_steps * (2 * n * n * cin + 2 * n * cin * hid
                       + 2 * n * hid * cout + 2 * n * n * cout
                       + 2 * n * cout * OUT_PAD)
    bytes_accessed = (x_bf.size * 2 + a_bf.size * 2 + w1_bf.size * 2
                      + w2_bf.size * 2 + wf_pad.size * 2
                      + b1.size * 4 + b2.size * 4 + bf_pad.size * 4
                      + t_steps * n * OUT_PAD * 4)

    out_pad = pl.pallas_call(
        stgcn_kernel,
        out_shape=jax.ShapeDtypeStruct((t_steps, n, OUT_PAD), jnp.float32),
        grid=(t_steps,),
        in_specs=[
            pl.BlockSpec((n, n), lambda t: (0, 0)),            # A_hat (resident)
            pl.BlockSpec((1, n, cin), lambda t: (t, 0, 0)),    # X[t]  (streamed)
            pl.BlockSpec((cin, hid), lambda t: (0, 0)),        # W1    (resident)
            pl.BlockSpec((1, hid), lambda t: (0, 0)),          # b1
            pl.BlockSpec((hid, cout), lambda t: (0, 0)),       # W2
            pl.BlockSpec((1, cout), lambda t: (0, 0)),         # b2
            pl.BlockSpec((cout, OUT_PAD), lambda t: (0, 0)),   # Wfc (padded)
            pl.BlockSpec((1, OUT_PAD), lambda t: (0, 0)),      # bfc (padded)
        ],
        out_specs=pl.BlockSpec((1, n, OUT_PAD), lambda t: (t, 0, 0)),
        compiler_params=pltpu.CompilerParams(
            dimension_semantics=("parallel",)),
        cost_estimate=pl.CostEstimate(flops=flops, transcendentals=0,
                                      bytes_accessed=bytes_accessed),
    )(a_bf, x_bf, w1_bf, b1, w2_bf, b2, wf_pad, bf_pad)

    return out_pad[:, :, :2]                                   # [T, N, 2]


# ----------------------------------------------------------------------------
# Glue: dense gcn_norm adjacency (PyG GCNConv semantics, add_self_loops=True).
# TODO(synk): for large sparse graphs, replace the dense A_hat matmuls with a
# scalar-prefetch gather/segment-sum kernel instead of materializing N x N.
# ----------------------------------------------------------------------------
def gcn_norm_dense(edge_index, num_nodes):
    src = edge_index[0]
    dst = edge_index[1]
    loop = jnp.arange(num_nodes, dtype=edge_index.dtype)
    src = jnp.concatenate([src, loop])
    dst = jnp.concatenate([dst, loop])
    deg = jnp.zeros((num_nodes,), jnp.float32).at[dst].add(1.0)
    dinv = jnp.where(deg > 0, 1.0 / jnp.sqrt(deg), 0.0)
    norm = dinv[src] * dinv[dst]
    # out[i] = sum over edges (j -> i) norm_ji * x[j]  =>  A_hat[i, j] += norm
    a_hat = jnp.zeros((num_nodes, num_nodes), jnp.float32).at[dst, src].add(norm)
    return a_hat


# ----------------------------------------------------------------------------
# Deterministic parameter init (shapes follow the module's __init__).
# ----------------------------------------------------------------------------
def init_params(key, in_channels, hidden_channels, out_channels):
    k1, k2, k3 = jax.random.split(key, 3)

    def glorot(k, fan_in, fan_out):
        lim = jnp.sqrt(6.0 / (fan_in + fan_out))
        return jax.random.uniform(k, (fan_in, fan_out), jnp.float32, -lim, lim)

    w1 = glorot(k1, in_channels, hidden_channels)
    b1 = jnp.zeros((1, hidden_channels), jnp.float32)
    w2 = glorot(k2, hidden_channels, out_channels)
    b2 = jnp.zeros((1, out_channels), jnp.float32)
    wf = glorot(k3, out_channels, 2)      # fc weight stored as [out_channels, 2]
    bf = jnp.zeros((1, 2), jnp.float32)
    return (w1, b1, w2, b2, wf, bf)


# ----------------------------------------------------------------------------
# Pure-JAX f32 reference for correctness check (per timestep).
# ----------------------------------------------------------------------------
def stgcn_ref(a_hat, x, params):
    w1, b1, w2, b2, wf, bf = params
    h = jnp.maximum(a_hat @ (x @ w1) + b1, 0.0)
    h = jnp.maximum(a_hat @ (h @ w2) + b2, 0.0)
    return h @ wf + bf


if __name__ == "__main__":
    key = jax.random.PRNGKey(0)
    k_x, k_e, k_p = jax.random.split(key, 3)

    num_timesteps = 8
    num_nodes = 16
    in_channels = 4
    hidden_channels = 32
    out_channels = 8
    num_edges = 40

    # node features over T timesteps [T, N, Cin]; one shared graph
    x_seq = jax.random.normal(
        k_x, (num_timesteps, num_nodes, in_channels), jnp.float32)
    edge_index = jax.random.randint(
        k_e, (2, num_edges), 0, num_nodes, jnp.int32)

    a_hat = gcn_norm_dense(edge_index, num_nodes)
    params = init_params(k_p, in_channels, hidden_channels, out_channels)

    out = stgcn_forward(a_hat, x_seq, params)
    out = jax.block_until_ready(out)

    ref = jax.vmap(lambda xt: stgcn_ref(a_hat, xt, params))(x_seq)
    assert out.shape == (num_timesteps, num_nodes, 2)
    # bf16 MXU operands + layer-1 reassociation => loose tolerance vs f32 ref
    assert jnp.allclose(out, ref, atol=5e-2, rtol=5e-2), "mismatch vs reference"

    print("KERNEL_OK")
</pallas_src>

<mosaic_0001>
module attributes {stable_mosaic.version = 11 : i64} {
  func.func @stgcn_kernel(%arg0: i32, %arg1: memref<16x16xbf16, #tpu.memory_space<vmem>>, %arg2: memref<1x16x4xbf16, #tpu.memory_space<vmem>>, %arg3: memref<4x32xbf16, #tpu.memory_space<vmem>>, %arg4: memref<1x32xf32, #tpu.memory_space<vmem>>, %arg5: memref<32x8xbf16, #tpu.memory_space<vmem>>, %arg6: memref<1x8xf32, #tpu.memory_space<vmem>>, %arg7: memref<8x128xbf16, #tpu.memory_space<vmem>>, %arg8: memref<1x128xf32, #tpu.memory_space<vmem>>, %arg9: memref<1x16x128xf32, #tpu.memory_space<vmem>>) attributes {dimension_semantics = [#tpu.dimension_semantics<parallel>], iteration_bounds = array<i64: 8>, scalar_prefetch = 0 : i64, scratch_operands = 0 : i64, tpu.core_type = #tpu.core_type<tc>, window_params = [{pipeline_mode = #tpu.pipeline_mode<synchronous>, transform_indices = @transform_0, window_bounds = array<i64: 16, 16>}, {transform_indices = @transform_1, window_bounds = array<i64: 1, 16, 4>}, {pipeline_mode = #tpu.pipeline_mode<synchronous>, transform_indices = @transform_2, window_bounds = array<i64: 4, 32>}, {pipeline_mode = #tpu.pipeline_mode<synchronous>, transform_indices = @transform_3, window_bounds = array<i64: 1, 32>}, {pipeline_mode = #tpu.pipeline_mode<synchronous>, transform_indices = @transform_4, window_bounds = array<i64: 32, 8>}, {pipeline_mode = #tpu.pipeline_mode<synchronous>, transform_indices = @transform_5, window_bounds = array<i64: 1, 8>}, {pipeline_mode = #tpu.pipeline_mode<synchronous>, transform_indices = @transform_6, window_bounds = array<i64: 8, 128>}, {pipeline_mode = #tpu.pipeline_mode<synchronous>, transform_indices = @transform_7, window_bounds = array<i64: 1, 128>}, {transform_indices = @transform_8, window_bounds = array<i64: 1, 16, 128>}]} {
    %c0 = arith.constant 0 : index
    %c0_0 = arith.constant 0 : index
    %0 = vector.load %arg1[%c0, %c0_0] : memref<16x16xbf16, #tpu.memory_space<vmem>>, vector<16x16xbf16>
    %c0_1 = arith.constant 0 : index
    %c0_2 = arith.constant 0 : index
    %c0_3 = arith.constant 0 : index
    %1 = vector.load %arg2[%c0_1, %c0_2, %c0_3] : memref<1x16x4xbf16, #tpu.memory_space<vmem>>, vector<1x16x4xbf16>
    %2 = vector.shape_cast %1 : vector<1x16x4xbf16> to vector<16x4xbf16>
    %cst = arith.constant dense<0.000000e+00> : vector<16x4xf32>
    %3 = tpu.matmul %0, %2, %cst {dimension_numbers = #tpu.dot_dimension_numbers<[1], [0], [0], [1], [0, 0, 1, 1], [], []>} : vector<16x16xbf16>, vector<16x4xbf16>, vector<16x4xf32> -> vector<16x4xf32>
    %4 = arith.truncf %3 : vector<16x4xf32> to vector<16x4xbf16>
    %c0_4 = arith.constant 0 : index
    %c0_5 = arith.constant 0 : index
    %5 = vector.load %arg3[%c0_4, %c0_5] : memref<4x32xbf16, #tpu.memory_space<vmem>>, vector<4x32xbf16>
    %cst_6 = arith.constant dense<0.000000e+00> : vector<16x32xf32>
    %6 = tpu.matmul %4, %5, %cst_6 {dimension_numbers = #tpu.dot_dimension_numbers<[1], [0], [0], [1], [0, 0, 1, 1], [], []>} : vector<16x4xbf16>, vector<4x32xbf16>, vector<16x32xf32> -> vector<16x32xf32>
    %c0_7 = arith.constant 0 : index
    %c0_8 = arith.constant 0 : index
    %7 = vector.load %arg4[%c0_7, %c0_8] : memref<1x32xf32, #tpu.memory_space<vmem>>, vector<1x32xf32>
    %8 = vector.broadcast %7 : vector<1x32xf32> to vector<16x32xf32>
    %9 = arith.addf %6, %8 : vector<16x32xf32>
    %cst_9 = arith.constant 0.000000e+00 : f32
    %10 = vector.broadcast %cst_9 : f32 to vector<16x32xf32>
    %11 = arith.maximumf %9, %10 : vector<16x32xf32>
    %12 = arith.truncf %11 : vector<16x32xf32> to vector<16x32xbf16>
    %c0_10 = arith.constant 0 : index
    %c0_11 = arith.constant 0 : index
    %13 = vector.load %arg5[%c0_10, %c0_11] : memref<32x8xbf16, #tpu.memory_space<vmem>>, vector<32x8xbf16>
    %cst_12 = arith.constant dense<0.000000e+00> : vector<16x8xf32>
    %14 = tpu.matmul %12, %13, %cst_12 {dimension_numbers = #tpu.dot_dimension_numbers<[1], [0], [0], [1], [0, 0, 1, 1], [], []>} : vector<16x32xbf16>, vector<32x8xbf16>, vector<16x8xf32> -> vector<16x8xf32>
    %15 = arith.truncf %14 : vector<16x8xf32> to vector<16x8xbf16>
    %cst_13 = arith.constant dense<0.000000e+00> : vector<16x8xf32>
    %16 = tpu.matmul %0, %15, %cst_13 {dimension_numbers = #tpu.dot_dimension_numbers<[1], [0], [0], [1], [0, 0, 1, 1], [], []>} : vector<16x16xbf16>, vector<16x8xbf16>, vector<16x8xf32> -> vector<16x8xf32>
    %c0_14 = arith.constant 0 : index
    %c0_15 = arith.constant 0 : index
    %17 = vector.load %arg6[%c0_14, %c0_15] : memref<1x8xf32, #tpu.memory_space<vmem>>, vector<1x8xf32>
    %18 = vector.broadcast %17 : vector<1x8xf32> to vector<16x8xf32>
    %19 = arith.addf %16, %18 : vector<16x8xf32>
    %cst_16 = arith.constant 0.000000e+00 : f32
    %20 = vector.broadcast %cst_16 : f32 to vector<16x8xf32>
    %21 = arith.maximumf %19, %20 : vector<16x8xf32>
    %22 = arith.truncf %21 : vector<16x8xf32> to vector<16x8xbf16>
    %c0_17 = arith.constant 0 : index
    %c0_18 = arith.constant 0 : index
    %23 = vector.load %arg7[%c0_17, %c0_18] : memref<8x128xbf16, #tpu.memory_space<vmem>>, vector<8x128xbf16>
    %cst_19 = arith.constant dense<0.000000e+00> : vector<16x128xf32>
    %24 = tpu.matmul %22, %23, %cst_19 {dimension_numbers = #tpu.dot_dimension_numbers<[1], [0], [0], [1], [0, 0, 1, 1], [], []>} : vector<16x8xbf16>, vector<8x128xbf16>, vector<16x128xf32> -> vector<16x128xf32>
    %c0_20 = arith.constant 0 : index
    %c0_21 = arith.constant 0 : index
    %25 = vector.load %arg8[%c0_20, %c0_21] : memref<1x128xf32, #tpu.memory_space<vmem>>, vector<1x128xf32>
    %26 = vector.broadcast %25 : vector<1x128xf32> to vector<16x128xf32>
    %27 = arith.addf %24, %26 : vector<16x128xf32>
    %c0_22 = arith.constant 0 : index
    %c0_23 = arith.constant 0 : index
    %c0_24 = arith.constant 0 : index
    %28 = vector.load %arg9[%c0_22, %c0_23, %c0_24] : memref<1x16x128xf32, #tpu.memory_space<vmem>>, vector<1x16x128xf32>
    %29 = vector.shape_cast %28 : vector<1x16x128xf32> to vector<16x128xf32>
    %30 = vector.shape_cast %27 : vector<16x128xf32> to vector<1x16x128xf32>
    tpu.vector_store %arg9[%c0_22, %c0_23, %c0_24], %30 {strides = array<i32>} : memref<1x16x128xf32, #tpu.memory_space<vmem>>, vector<1x16x128xf32>,
    return
  }
  func.func @transform_0(%arg0: i32) -> (i32, i32) {
    %c0_i32 = arith.constant 0 : i32
    %c0_i32_0 = arith.constant 0 : i32
    %c0_i32_1 = arith.constant 0 : i32
    return %c0_i32, %c0_i32_0 : i32, i32
  }
  func.func @transform_1(%arg0: i32) -> (i32, i32, i32) {
    %c0_i32 = arith.constant 0 : i32
    %c0_i32_0 = arith.constant 0 : i32
    %c0_i32_1 = arith.constant 0 : i32
    return %arg0, %c0_i32, %c0_i32_0 : i32, i32, i32
  }
  func.func @transform_2(%arg0: i32) -> (i32, i32) {
    %c0_i32 = arith.constant 0 : i32
    %c0_i32_0 = arith.constant 0 : i32
    %c0_i32_1 = arith.constant 0 : i32
    return %c0_i32, %c0_i32_0 : i32, i32
  }
  func.func @transform_3(%arg0: i32) -> (i32, i32) {
    %c0_i32 = arith.constant 0 : i32
    %c0_i32_0 = arith.constant 0 : i32
    %c0_i32_1 = arith.constant 0 : i32
    return %c0_i32, %c0_i32_0 : i32, i32
  }
  func.func @transform_4(%arg0: i32) -> (i32, i32) {
    %c0_i32 = arith.constant 0 : i32
    %c0_i32_0 = arith.constant 0 : i32
    %c0_i32_1 = arith.constant 0 : i32
    return %c0_i32, %c0_i32_0 : i32, i32
  }
  func.func @transform_5(%arg0: i32) -> (i32, i32) {
    %c0_i32 = arith.constant 0 : i32
    %c0_i32_0 = arith.constant 0 : i32
    %c0_i32_1 = arith.constant 0 : i32
    return %c0_i32, %c0_i32_0 : i32, i32
  }
  func.func @transform_6(%arg0: i32) -> (i32, i32) {
    %c0_i32 = arith.constant 0 : i32
    %c0_i32_0 = arith.constant 0 : i32
    %c0_i32_1 = arith.constant 0 : i32
    return %c0_i32, %c0_i32_0 : i32, i32
  }
  func.func @transform_7(%arg0: i32) -> (i32, i32) {
    %c0_i32 = arith.constant 0 : i32
    %c0_i32_0 = arith.constant 0 : i32
    %c0_i32_1 = arith.constant 0 : i32
    return %c0_i32, %c0_i32_0 : i32, i32
  }
  func.func @transform_8(%arg0: i32) -> (i32, i32, i32) {
    %c0_i32 = arith.constant 0 : i32
    %c0_i32_0 = arith.constant 0 : i32
    %c0_i32_1 = arith.constant 0 : i32
    return %arg0, %c0_i32, %c0_i32_0 : i32, i32, i32
  }
}

</mosaic_0001>

<llo_original>
// kernel: tpu_custom_call.1
$region0: #{tpu_custom_call.1}
  #allocation0 [shape = 'u32[]', space=smem, size = 0x4, offset = 0x4, fixed_abs, tag = 'smem constant byte address 0x4 - core index']
  #allocation1 [shape = 'u32[144,128]{1,0:T(1,128)}', space=vmem, size = 0x12000, scoped, tag = 'internal scratch']
  %s0 = inlined_call_operand.vmem [shape: bf16[16,16], index: 0, kind: input, shape index: {}]
  %s1 = inlined_call_operand.vmem [shape: bf16[8,16,4], index: 1, kind: input, shape index: {}]
  %s2 = inlined_call_operand.vmem [shape: bf16[4,32], index: 2, kind: input, shape index: {}]
  %s3 = inlined_call_operand.vmem [shape: f32[1,32], index: 3, kind: input, shape index: {}]
  %s4 = inlined_call_operand.vmem [shape: bf16[32,8], index: 4, kind: input, shape index: {}]
  %s5 = inlined_call_operand.vmem [shape: f32[1,8], index: 5, kind: input, shape index: {}]
  %s6 = inlined_call_operand.vmem [shape: bf16[8,128], index: 6, kind: input, shape index: {}]
  %s7 = inlined_call_operand.vmem [shape: f32[1,128], index: 7, kind: input, shape index: {}]
  %s8 = inlined_call_operand.hbm [shape: f32[8,16,128], index: 8, kind: output, shape index: {}]
  %s9 = sld [smem:[#allocation0]]
  $region65: #{tpu_custom_call.1} parent=0
    _
  %s11 = ssub.s32 1, %s9
  %s12 = scalar_select 0, %s11, %s9
  $region1: #{tpu_custom_call.1} parent=0
    #allocation2 [shape = 'u8[16384]{0}', space=vmem, size = 0x4000, scoped, tag = 'output window, operand 0']
    #allocation3 [shape = 's32[2]{0}', space=sflag, size = 0x8, scoped, tag = 'scoped memory for tpu_custom_call.1']
    %13 = vsyncpa [#allocation3], 0
    %s14 = scalar_lea.sflag [#allocation3], 1
    %15 = vsyncpa %s14, 0
    loop: start=0, step=1, limit=10
    $region2: #{tpu_custom_call.1} parent=1 // loop_pre_header
      _
    $region3: #{tpu_custom_call.1} parent=1 // loop_header
      %s17 = sphi 0, %s21
      %p18 = scmp.ge.s32.totalorder %s17, 10
      %s25 = sphi 0, %s25
      %s27 = sphi 0, %s25
      %s28 = sphi 0, %s27
      %s42 = sphi 0, %s28
      %s48 = sphi 0, %s50
      %s51 = sphi 0, %s48
      %s52 = sphi 0, %s51
      %s68 = sphi 0, %s52
      %s72 = sphi 0, %s72
      %s74 = sphi 0, %s72
      %s75 = sphi 0, %s74
      %s89 = sphi 0, %s75
      %s93 = sphi 0, %s93
      %s95 = sphi 0, %s93
      %s96 = sphi 0, %s95
      %s110 = sphi 0, %s96
      %s114 = sphi 0, %s114
      %s116 = sphi 0, %s114
      %s117 = sphi 0, %s116
      %s131 = sphi 0, %s117
      %s135 = sphi 0, %s135
      %s137 = sphi 0, %s135
      %s138 = sphi 0, %s137
      %s152 = sphi 0, %s138
      %s156 = sphi 0, %s156
      %s158 = sphi 0, %s156
      %s159 = sphi 0, %s158
      %s173 = sphi 0, %s159
      %s177 = sphi 0, %s177
      %s179 = sphi 0, %s177
      %s180 = sphi 0, %s179
      %s194 = sphi 0, %s180
      %s200 = sphi 0, %s202
      %s203 = sphi 0, %s200
      %s204 = sphi 0, %s203
      %s220 = sphi 0, %s204
    $region4: #{tpu_custom_call.1} parent=1 // loop_header_branch
      %20 = sbr.rel (%p18) target = $region8
    $region5: #{tpu_custom_call.1} parent=1 // loop_body
      %s22 = ssub.s32 %s17, 1
      %s23 = ssub.s32 %s17, 2
      %s24 = sadd.s32 %s17, 1
      %s26 = sadd.s32 %s25, 1
      %p29 = scmp.eq.s32.totalorder %s17, 7
      %p30 = scmp.ne.s32.totalorder %s25, %s27
      %p31 = scmp.eq.s32.totalorder %s17, 0
      %p32 = por %p30, %p31
      %p33 = scmp.ne.s32.totalorder %s25, %s27
      %p34 = scmp.eq.s32.totalorder %s22, 7
      %p35 = por %p33, %p34
      %p36 = scmp.ne.s32.totalorder %s27, %s28
      %p37 = scmp.eq.s32.totalorder %s22, 0
      %p38 = por %p36, %p37
      %p39 = scmp.ne.s32.totalorder %s27, %s28
      %p40 = scmp.eq.s32.totalorder %s23, 7
      %p41 = por %p39, %p40
      %p43 = scmp.ne.s32.totalorder %s28, %s42
      %p44 = scmp.eq.s32.totalorder %s23, 0
      %p45 = por %p43, %p44
      %s46 = ssub.s32 %s17, %s24
      %p47 = scmp.eq.s32.totalorder %s46, 0
      %s49 = sadd.s32 %s48, 1
      %s50 = scalar_select %p47, %s48, %s49
      %p53 = pneg %p47
      %p54 = scmp.eq.s32.totalorder %s17, 7
      %p55 = por %p53, %p54
      %p56 = scmp.ne.s32.totalorder %s48, %s51
      %p57 = scmp.eq.s32.totalorder %s17, 0
      %p58 = por %p56, %p57
      %p59 = scmp.ne.s32.totalorder %s48, %s51
      %p60 = scmp.eq.s32.totalorder %s22, 7
      %p61 = por %p59, %p60
      %p62 = scmp.ne.s32.totalorder %s51, %s52
      %p63 = scmp.eq.s32.totalorder %s22, 0
      %p64 = por %p62, %p63
      %p65 = scmp.ne.s32.totalorder %s51, %s52
      %p66 = scmp.eq.s32.totalorder %s23, 7
      %p67 = por %p65, %p66
      %p69 = scmp.ne.s32.totalorder %s52, %s68
      %p70 = scmp.eq.s32.totalorder %s23, 0
      %p71 = por %p69, %p70
      %s73 = sadd.s32 %s72, 1
      %p76 = scmp.eq.s32.totalorder %s17, 7
      %p77 = scmp.ne.s32.totalorder %s72, %s74
      %p78 = scmp.eq.s32.totalorder %s17, 0
      %p79 = por %p77, %p78
      %p80 = scmp.ne.s32.totalorder %s72, %s74
      %p81 = scmp.eq.s32.totalorder %s22, 7
      %p82 = por %p80, %p81
      %p83 = scmp.ne.s32.totalorder %s74, %s75
      %p84 = scmp.eq.s32.totalorder %s22, 0
      %p85 = por %p83, %p84
      %p86 = scmp.ne.s32.totalorder %s74, %s75
      %p87 = scmp.eq.s32.totalorder %s23, 7
      %p88 = por %p86, %p87
      %p90 = scmp.ne.s32.totalorder %s75, %s89
      %p91 = scmp.eq.s32.totalorder %s23, 0
      %p92 = por %p90, %p91
      %s94 = sadd.s32 %s93, 1
      %p97 = scmp.eq.s32.totalorder %s17, 7
      %p98 = scmp.ne.s32.totalorder %s93, %s95
      %p99 = scmp.eq.s32.totalorder %s17, 0
      %p100 = por %p98, %p99
      %p101 = scmp.ne.s32.totalorder %s93, %s95
      %p102 = scmp.eq.s32.totalorder %s22, 7
      %p103 = por %p101, %p102
      %p104 = scmp.ne.s32.totalorder %s95, %s96
      %p105 = scmp.eq.s32.totalorder %s22, 0
      %p106 = por %p104, %p105
      %p107 = scmp.ne.s32.totalorder %s95, %s96
      %p108 = scmp.eq.s32.totalorder %s23, 7
      %p109 = por %p107, %p108
      %p111 = scmp.ne.s32.totalorder %s96, %s110
      %p112 = scmp.eq.s32.totalorder %s23, 0
      %p113 = por %p111, %p112
      %s115 = sadd.s32 %s114, 1
      %p118 = scmp.eq.s32.totalorder %s17, 7
      %p119 = scmp.ne.s32.totalorder %s114, %s116
      %p120 = scmp.eq.s32.totalorder %s17, 0
      %p121 = por %p119, %p120
      %p122 = scmp.ne.s32.totalorder %s114, %s116
      %p123 = scmp.eq.s32.totalorder %s22, 7
      %p124 = por %p122, %p123
      %p125 = scmp.ne.s32.totalorder %s116, %s117
      %p126 = scmp.eq.s32.totalorder %s22, 0
      %p127 = por %p125, %p126
      %p128 = scmp.ne.s32.totalorder %s116, %s117
      %p129 = scmp.eq.s32.totalorder %s23, 7
      %p130 = por %p128, %p129
      %p132 = scmp.ne.s32.totalorder %s117, %s131
      %p133 = scmp.eq.s32.totalorder %s23, 0
      %p134 = por %p132, %p133
      %s136 = sadd.s32 %s135, 1
      %p139 = scmp.eq.s32.totalorder %s17, 7
      %p140 = scmp.ne.s32.totalorder %s135, %s137
      %p141 = scmp.eq.s32.totalorder %s17, 0
      %p142 = por %p140, %p141
      %p143 = scmp.ne.s32.totalorder %s135, %s137
      %p144 = scmp.eq.s32.totalorder %s22, 7
      %p145 = por %p143, %p144
      %p146 = scmp.ne.s32.totalorder %s137, %s138
      %p147 = scmp.eq.s32.totalorder %s22, 0
      %p148 = por %p146, %p147
      %p149 = scmp.ne.s32.totalorder %s137, %s138
      %p150 = scmp.eq.s32.totalorder %s23, 7
      %p151 = por %p149, %p150
      %p153 = scmp.ne.s32.totalorder %s138, %s152
      %p154 = scmp.eq.s32.totalorder %s23, 0
      %p155 = por %p153, %p154
      %s157 = sadd.s32 %s156, 1
      %p160 = scmp.eq.s32.totalorder %s17, 7
      %p161 = scmp.ne.s32.totalorder %s156, %s158
      %p162 = scmp.eq.s32.totalorder %s17, 0
      %p163 = por %p161, %p162
      %p164 = scmp.ne.s32.totalorder %s156, %s158
      %p165 = scmp.eq.s32.totalorder %s22, 7
      %p166 = por %p164, %p165
      %p167 = scmp.ne.s32.totalorder %s158, %s159
      %p168 = scmp.eq.s32.totalorder %s22, 0
      %p169 = por %p167, %p168
      %p170 = scmp.ne.s32.totalorder %s158, %s159
      %p171 = scmp.eq.s32.totalorder %s23, 7
      %p172 = por %p170, %p171
      %p174 = scmp.ne.s32.totalorder %s159, %s173
      %p175 = scmp.eq.s32.totalorder %s23, 0
      %p176 = por %p174, %p175
      %s178 = sadd.s32 %s177, 1
      %p181 = scmp.eq.s32.totalorder %s17, 7
      %p182 = scmp.ne.s32.totalorder %s177, %s179
      %p183 = scmp.eq.s32.totalorder %s17, 0
      %p184 = por %p182, %p183
      %p185 = scmp.ne.s32.totalorder %s177, %s179
      %p186 = scmp.eq.s32.totalorder %s22, 7
      %p187 = por %p185, %p186
      %p188 = scmp.ne.s32.totalorder %s179, %s180
      %p189 = scmp.eq.s32.totalorder %s22, 0
      %p190 = por %p188, %p189
      %p191 = scmp.ne.s32.totalorder %s179, %s180
      %p192 = scmp.eq.s32.totalorder %s23, 7
      %p193 = por %p191, %p192
      %p195 = scmp.ne.s32.totalorder %s180, %s194
      %p196 = scmp.eq.s32.totalorder %s23, 0
      %p197 = por %p195, %p196
      %s198 = ssub.s32 %s17, %s24
      %p199 = scmp.eq.s32.totalorder %s198, 0
      %s201 = sadd.s32 %s200, 1
      %s202 = scalar_select %p199, %s200, %s201
      %p205 = pneg %p199
      %p206 = scmp.eq.s32.totalorder %s17, 7
      %p207 = por %p205, %p206
      %p208 = scmp.ne.s32.totalorder %s200, %s203
      %p209 = scmp.eq.s32.totalorder %s17, 0
      %p210 = por %p208, %p209
      %p211 = scmp.ne.s32.totalorder %s200, %s203
      %p212 = scmp.eq.s32.totalorder %s22, 7
      %p213 = por %p211, %p212
      %p214 = scmp.ne.s32.totalorder %s203, %s204
      %p215 = scmp.eq.s32.totalorder %s22, 0
      %p216 = por %p214, %p215
      %p217 = scmp.ne.s32.totalorder %s203, %s204
      %p218 = scmp.eq.s32.totalorder %s23, 7
      %p219 = por %p217, %p218
      %p221 = scmp.ne.s32.totalorder %s204, %s220
      %p222 = scmp.eq.s32.totalorder %s23, 0
      %p223 = por %p221, %p222
      %p224 = scmp.le.s32.totalorder 1, %s17
      %p225 = scmp.lt.s32.totalorder %s17, 9
      %p226 = pnand %p224, %p225
      %p227 = pneg %p226
      // Predicated region
      $region9: #{tpu_custom_call.1} parent=5 // pred_check
        _
      $region10: #{tpu_custom_call.1} parent=5 // pred_check_branch
        %229 = sbr.rel (%p226) target = $region12
      $region11: #{tpu_custom_call.1} parent=5 // pred_region
        %s230 = ssub.s32 %s17, 1
        // Predicated region
        $region13: #{tpu_custom_call.1} parent=11 // pred_check
          %p231 = pneg %p38
        $region14: #{tpu_custom_call.1} parent=11 // pred_check_branch
          %233 = sbr.rel (%p231) target = $region16
        $region15: #{tpu_custom_call.1} parent=11 // pred_region
          _
        $region16: #{tpu_custom_call.1} parent=11 // pred_fallthru
          _
        // Predicated region
        $region17: #{tpu_custom_call.1} parent=11 // pred_check
          %p234 = pneg %p85
        $region18: #{tpu_custom_call.1} parent=11 // pred_check_branch
          %236 = sbr.rel (%p234) target = $region20
        $region19: #{tpu_custom_call.1} parent=11 // pred_region
          _
        $region20: #{tpu_custom_call.1} parent=11 // pred_fallthru
          _
        // Predicated region
        $region21: #{tpu_custom_call.1} parent=11 // pred_check
          %p237 = pneg %p106
        $region22: #{tpu_custom_call.1} parent=11 // pred_check_branch
          %239 = sbr.rel (%p237) target = $region24
        $region23: #{tpu_custom_call.1} parent=11 // pred_region
          _
        $region24: #{tpu_custom_call.1} parent=11 // pred_fallthru
          _
        // Predicated region
        $region25: #{tpu_custom_call.1} parent=11 // pred_check
          %p240 = pneg %p127
        $region26: #{tpu_custom_call.1} parent=11 // pred_check_branch
          %242 = sbr.rel (%p240) target = $region28
        $region27: #{tpu_custom_call.1} parent=11 // pred_region
          _
        $region28: #{tpu_custom_call.1} parent=11 // pred_fallthru
          _
        // Predicated region
        $region29: #{tpu_custom_call.1} parent=11 // pred_check
          %p243 = pneg %p148
        $region30: #{tpu_custom_call.1} parent=11 // pred_check_branch
          %245 = sbr.rel (%p243) target = $region32
        $region31: #{tpu_custom_call.1} parent=11 // pred_region
          _
        $region32: #{tpu_custom_call.1} parent=11 // pred_fallthru
          _
        // Predicated region
        $region33: #{tpu_custom_call.1} parent=11 // pred_check
          %p246 = pneg %p169
        $region34: #{tpu_custom_call.1} parent=11 // pred_check_branch
          %248 = sbr.rel (%p246) target = $region36
        $region35: #{tpu_custom_call.1} parent=11 // pred_region
          _
        $region36: #{tpu_custom_call.1} parent=11 // pred_fallthru
          _
        // Predicated region
        $region37: #{tpu_custom_call.1} parent=11 // pred_check
          %p249 = pneg %p190
        $region38: #{tpu_custom_call.1} parent=11 // pred_check_branch
          %251 = sbr.rel (%p249) target = $region40
        $region39: #{tpu_custom_call.1} parent=11 // pred_region
          _
        $region40: #{tpu_custom_call.1} parent=11 // pred_fallthru
          _
      $region12: #{tpu_custom_call.1} parent=5 // pred_fallthru
        _
      %p252 = scmp.lt.s32.totalorder %s17, 8
      // Predicated region
      $region41: #{tpu_custom_call.1} parent=5 // pred_check
        %p253 = pneg %p252
      $region42: #{tpu_custom_call.1} parent=5 // pred_check_branch
        %255 = sbr.rel (%p253) target = $region44
      $region43: #{tpu_custom_call.1} parent=5 // pred_region
        // Predicated region
        $region45: #{tpu_custom_call.1} parent=43 // pred_check
          %p256 = pneg %p58
        $region46: #{tpu_custom_call.1} parent=43 // pred_check_branch
          %258 = sbr.rel (%p256) target = $region48
        $region47: #{tpu_custom_call.1} parent=43 // pred_region
          %p259 = scmp.lt.s32.totalorder %s17, 7
          %s260 = scalar_select %p259, %s17, 7
          %s261 = smul.addr %s260, 2
          %s262 = smul.addr %s261, 4
          %s263 = scalar_lea.vmem %s1, %s262
        $region48: #{tpu_custom_call.1} parent=43 // pred_fallthru
          _
      $region44: #{tpu_custom_call.1} parent=5 // pred_fallthru
        _
      %p264 = scmp.le.s32.totalorder 1, %s17
      %p265 = scmp.lt.s32.totalorder %s17, 9
      %p266 = pnand %p264, %p265
      %p267 = pneg %p266
      // Predicated region
      $region49: #{tpu_custom_call.1} parent=5 // pred_check
        _
      $region50: #{tpu_custom_call.1} parent=5 // pred_check_branch
        %269 = sbr.rel (%p266) target = $region52
      $region51: #{tpu_custom_call.1} parent=5 // pred_region
        %s270 = ssub.s32 %s17, 1
        %p271 = pneg %p38
        %p272 = pneg %p35
        %p273 = scmp.lt.s32.totalorder %s22, 7
        %s274 = scalar_select %p273, %s22, 7
        %s275 = smul.addr %s274, 2
        %s276 = smul.addr %s275, 4
        %s277 = scalar_lea.vmem %s1, %s276
        %p278 = pneg %p64
        %p279 = pneg %p61
        %p280 = pneg %p85
        %p281 = pneg %p82
        %p282 = pneg %p106
        %p283 = pneg %p103
        %p284 = pneg %p127
        %p285 = pneg %p124
        %p286 = pneg %p148
        %p287 = pneg %p145
        %p288 = pneg %p169
        %p289 = pneg %p166
        %p290 = pneg %p190
        %p291 = pneg %p187
        %p292 = pneg %p216
        %p293 = pneg %p213
        %s294 = sand.u32 %s203, 1
        %s295 = scalar_lea.sflag [#allocation3], %s294
        %s296 = sand.u32 %s203, 1
        %s297 = smul.addr %s296, 16
        %s298 = scalar_lea.vmem [#allocation2], %s297
        %p299 = scmp.lt.s32.totalorder %s22, 7
        %s300 = scalar_select %p299, %s22, 7
        %s301 = smul.addr %s300, 2
        %s302 = smul.addr %s301, 4
        %s303 = scalar_lea.vmem %s1, %s302
        %v305 = vld [vmem:[%s0] sm:$0xf]
        %v306 = vld [vmem:[%s0 + $0x4] sm:$0xf]
        %v307 = vld [vmem:[%s303] sm:$0xf]
        %v308 = vld [vmem:[%s303 + $0x4] sm:$0xf]
        %v311 = vunpack.c.l.b16 %v305
        %v312 = vunpack.c.l.b16 %v306
        %v313 = vpack.c.b16 %v312, %v311
        %v316 = vunpack.c.l.b16 %v307
        %v317 = vunpack.c.l.b16 %v308
        %v318 = vpack.c.b16 %v317, %v316
        %vm320 = vcmask 130048
        %v322 = vsel %vm320, %v313, 0
        %324 = vmatprep.subr.bf16.mxu0 0
        %325 = vmatpush1.bf16.msra.mxu0 %v318
        %326 = vmatprep.subr.bf16.mxu0 0
        %327 = vmatpush1.bf16.msra.mxu0 0
        %328 = vmatprep.subr.bf16.mxu0 0
        %329 = vmatpush1.bf16.msra.mxu0 0
        %330 = vmatprep.subr.bf16.mxu0 0
        %331 = vmatpush1.bf16.msra.mxu0 0
        %332 = vmatprep.subr.bf16.mxu0 0
        %333 = vmatpush1.bf16.msra.mxu0 0
        %334 = vmatprep.subr.bf16.mxu0 0
        %335 = vmatpush1.bf16.msra.mxu0 0
        %336 = vmatprep.subr.bf16.mxu0 0
        %337 = vmatpush1.bf16.msra.mxu0 0
        %338 = vmatprep.subr.bf16.mxu0 0
        %339 = vmatpush1.bf16.msra.mxu0 0
        %340 = vmatprep.subr.bf16.mxu0 0
        %341 = vmatpush1.bf16.msra.mxu0 0
        %342 = vmatprep.subr.bf16.mxu0 0
        %343 = vmatpush1.bf16.msra.mxu0 0
        %344 = vmatprep.subr.bf16.mxu0 0
        %345 = vmatpush1.bf16.msra.mxu0 0
        %346 = vmatprep.subr.bf16.mxu0 0
        %347 = vmatpush1.bf16.msra.mxu0 0
        %348 = vmatprep.subr.bf16.mxu0 0
        %349 = vmatpush1.bf16.msra.mxu0 0
        %350 = vmatprep.subr.bf16.mxu0 0
        %351 = vmatpush1.bf16.msra.mxu0 0
        %352 = vmatprep.subr.bf16.mxu0 0
        %353 = vmatpush1.bf16.msra.mxu0 0
        %354 = vmatprep.subr.bf16.mxu0 0
        %355 = vmatpush1.bf16.msra.mxu0 0
        %356 = vmatprep.mubr.bf16.mxu0 0
        %357 = vmatmul.mubr.bf16.gmra.mrb[0].mxu0 %v322
        %v358 = vpop.f32.mrb[0].mxu0
        %v359 = vadd.f32 0.0, %v358
        %v360 = vpop.f32.mrb[0].mxu0
        %v361 = vpop.f32.mrb[0].mxu0
        %v362 = vadd.f32 0.0, %v361
        %v363 = vpop.f32.mrb[0].mxu0
        %364 = vdwg.mxu0
        %v365 = vpack.c.bf16 %v362, %v359
        %v366 = vld [vmem:[%s2] sm:$0x3]
        %v367 = vld [vmem:[%s3] sm:$0x1]
        %v369 = vlaneseq
        %v370 = vshrl.u32 %v369, 7
        %v371 = vsub.s32 0, %v370
        %v372 = vrot.slane %v367, %v371
        %vm374 = vcmask 31744
        %v376 = vsel %vm374, %v365, 0
        %vm378 = vcmask 1041408
        %v380 = vsel %vm378, %v366, 0
        %382 = vmatprep.subr.bf16.mxu0 0
        %383 = vmatpush1.bf16.msra.mxu0 %v380
        %384 = vmatprep.subr.bf16.mxu0 0
        %385 = vmatpush1.bf16.msra.mxu0 0
        %386 = vmatprep.subr.bf16.mxu0 0
        %387 = vmatpush1.bf16.msra.mxu0 0
        %388 = vmatprep.subr.bf16.mxu0 0
        %389 = vmatpush1.bf16.msra.mxu0 0
        %390 = vmatprep.subr.bf16.mxu0 0
        %391 = vmatpush1.bf16.msra.mxu0 0
        %392 = vmatprep.subr.bf16.mxu0 0
        %393 = vmatpush1.bf16.msra.mxu0 0
        %394 = vmatprep.subr.bf16.mxu0 0
        %395 = vmatpush1.bf16.msra.mxu0 0
        %396 = vmatprep.subr.bf16.mxu0 0
        %397 = vmatpush1.bf16.msra.mxu0 0
        %398 = vmatprep.subr.bf16.mxu0 0
        %399 = vmatpush1.bf16.msra.mxu0 0
        %400 = vmatprep.subr.bf16.mxu0 0
        %401 = vmatpush1.bf16.msra.mxu0 0
        %402 = vmatprep.subr.bf16.mxu0 0
        %403 = vmatpush1.bf16.msra.mxu0 0
        %404 = vmatprep.subr.bf16.mxu0 0
        %405 = vmatpush1.bf16.msra.mxu0 0
        %406 = vmatprep.subr.bf16.mxu0 0
        %407 = vmatpush1.bf16.msra.mxu0 0
        %408 = vmatprep.subr.bf16.mxu0 0
        %409 = vmatpush1.bf16.msra.mxu0 0
        %410 = vmatprep.subr.bf16.mxu0 0
        %411 = vmatpush1.bf16.msra.mxu0 0
        %412 = vmatprep.subr.bf16.mxu0 0
        %413 = vmatpush1.bf16.msra.mxu0 0
        %414 = vmatprep.mubr.bf16.mxu0 0
        %415 = vmatmul.mubr.bf16.gmra.mrb[0].mxu0 %v376
        %v416 = vpop.f32.mrb[0].mxu0
        %v417 = vadd.f32 %v372, %v416
        %v418 = vpop.f32.mrb[0].mxu0
        %v419 = vpop.f32.mrb[0].mxu0
        %v420 = vadd.f32 %v372, %v419
        %v421 = vpop.f32.mrb[0].mxu0
        %422 = vdwg.mxu0
        %v423 = vmax.f32 %v417, 0.0
        %v424 = vmax.f32 %v420, 0.0
        %v425 = vpack.c.bf16 %v424, %v423
        %v426 = vld [vmem:[%s4] sm:$0xf]
        %v427 = vld [vmem:[%s4 + $0x4] sm:$0xf]
        %v428 = vld [vmem:[%s4 + $0x8] sm:$0xf]
        %v429 = vld [vmem:[%s4 + $0xc] sm:$0xf]
        %v434 = vunpack.c.l.b16 %v426
        %v435 = vunpack.c.l.b16 %v427
        %v436 = vunpack.c.l.b16 %v428
        %v437 = vunpack.c.l.b16 %v429
        %v438 = vpack.c.b16 %v435, %v434
        %v439 = vpack.c.b16 %v437, %v436
        %vm442 = vcmask 261120
        %v444 = vsel %vm442, %v425, 0
        %446 = vmatprep.subr.bf16.mxu0 0
        %447 = vmatpush1.bf16.msra.mxu0 %v438
        %448 = vmatprep.subr.bf16.mxu0 0
        %449 = vmatpush1.bf16.msra.mxu0 %v439
        %450 = vmatprep.subr.bf16.mxu0 0
        %451 = vmatpush1.bf16.msra.mxu0 0
        %452 = vmatprep.subr.bf16.mxu0 0
        %453 = vmatpush1.bf16.msra.mxu0 0
        %454 = vmatprep.subr.bf16.mxu0 0
        %455 = vmatpush1.bf16.msra.mxu0 0
        %456 = vmatprep.subr.bf16.mxu0 0
        %457 = vmatpush1.bf16.msra.mxu0 0
        %458 = vmatprep.subr.bf16.mxu0 0
        %459 = vmatpush1.bf16.msra.mxu0 0
        %460 = vmatprep.subr.bf16.mxu0 0
        %461 = vmatpush1.bf16.msra.mxu0 0
        %462 = vmatprep.subr.bf16.mxu0 0
        %463 = vmatpush1.bf16.msra.mxu0 0
        %464 = vmatprep.subr.bf16.mxu0 0
        %465 = vmatpush1.bf16.msra.mxu0 0
        %466 = vmatprep.subr.bf16.mxu0 0
        %467 = vmatpush1.bf16.msra.mxu0 0
        %468 = vmatprep.subr.bf16.mxu0 0
        %469 = vmatpush1.bf16.msra.mxu0 0
        %470 = vmatprep.subr.bf16.mxu0 0
        %471 = vmatpush1.bf16.msra.mxu0 0
        %472 = vmatprep.subr.bf16.mxu0 0
        %473 = vmatpush1.bf16.msra.mxu0 0
        %474 = vmatprep.subr.bf16.mxu0 0
        %475 = vmatpush1.bf16.msra.mxu0 0
        %476 = vmatprep.subr.bf16.mxu0 0
        %477 = vmatpush1.bf16.msra.mxu0 0
        %478 = vmatprep.mubr.bf16.mxu0 0
        %479 = vmatmul.mubr.bf16.gmra.mrb[0].mxu0 %v444
        %v480 = vpop.f32.mrb[0].mxu0
        %v481 = vadd.f32 0.0, %v480
        %v482 = vpop.f32.mrb[0].mxu0
        %v483 = vpop.f32.mrb[0].mxu0
        %v484 = vadd.f32 0.0, %v483
        %v485 = vpop.f32.mrb[0].mxu0
        %486 = vdwg.mxu0
        %v487 = vpack.c.bf16 %v484, %v481
        %v488 = vld [vmem:[%s5] sm:$0x1]
        %v490 = vlaneseq
        %v491 = vshrl.u32 %v490, 7
        %v492 = vsub.s32 0, %v491
        %v493 = vrot.slane %v488, %v492
        %495 = vmatprep.subr.bf16.mxu0 0
        %496 = vmatpush1.bf16.msra.mxu0 %v487
        %497 = vmatprep.subr.bf16.mxu0 0
        %498 = vmatpush1.bf16.msra.mxu0 0
        %499 = vmatprep.subr.bf16.mxu0 0
        %500 = vmatpush1.bf16.msra.mxu0 0
        %501 = vmatprep.subr.bf16.mxu0 0
        %502 = vmatpush1.bf16.msra.mxu0 0
        %503 = vmatprep.subr.bf16.mxu0 0
        %504 = vmatpush1.bf16.msra.mxu0 0
        %505 = vmatprep.subr.bf16.mxu0 0
        %506 = vmatpush1.bf16.msra.mxu0 0
        %507 = vmatprep.subr.bf16.mxu0 0
        %508 = vmatpush1.bf16.msra.mxu0 0
        %509 = vmatprep.subr.bf16.mxu0 0
        %510 = vmatpush1.bf16.msra.mxu0 0
        %511 = vmatprep.subr.bf16.mxu0 0
        %512 = vmatpush1.bf16.msra.mxu0 0
        %513 = vmatprep.subr.bf16.mxu0 0
        %514 = vmatpush1.bf16.msra.mxu0 0
        %515 = vmatprep.subr.bf16.mxu0 0
        %516 = vmatpush1.bf16.msra.mxu0 0
        %517 = vmatprep.subr.bf16.mxu0 0
        %518 = vmatpush1.bf16.msra.mxu0 0
        %519 = vmatprep.subr.bf16.mxu0 0
        %520 = vmatpush1.bf16.msra.mxu0 0
        %521 = vmatprep.subr.bf16.mxu0 0
        %522 = vmatpush1.bf16.msra.mxu0 0
        %523 = vmatprep.subr.bf16.mxu0 0
        %524 = vmatpush1.bf16.msra.mxu0 0
        %525 = vmatprep.subr.bf16.mxu0 0
        %526 = vmatpush1.bf16.msra.mxu0 0
        %527 = vmatprep.mubr.bf16.mxu0 0
        %528 = vmatmul.mubr.bf16.gmra.mrb[0].mxu0 %v322
        %v529 = vpop.f32.mrb[0].mxu0
        %v530 = vadd.f32 %v493, %v529
        %v531 = vpop.f32.mrb[0].mxu0
        %v532 = vpop.f32.mrb[0].mxu0
        %v533 = vadd.f32 %v493, %v532
        %v534 = vpop.f32.mrb[0].mxu0
        %535 = vdwg.mxu0
        %v536 = vmax.f32 %v530, 0.0
        %v537 = vmax.f32 %v533, 0.0
        %v538 = vpack.c.bf16 %v537, %v536
        %v539 = vld [vmem:[%s6] sm:$0xf]
        %v540 = vld [vmem:[%s7] sm:$0x1]
        %v542 = vlaneseq
        %v543 = vshrl.u32 %v542, 7
        %v544 = vsub.s32 0, %v543
        %v545 = vrot.slane %v540, %v544
        %vm547 = vcmask 64512
        %v549 = vsel %vm547, %v538, 0
        %vm551 = vcmask 1043456
        %v553 = vsel %vm551, %v539, 0
        %555 = vmatprep.subr.bf16.mxu0 0
        %556 = vmatpush1.bf16.msra.mxu0 %v553
        %557 = vmatprep.subr.bf16.mxu0 0
        %558 = vmatpush1.bf16.msra.mxu0 0
        %559 = vmatprep.subr.bf16.mxu0 0
        %560 = vmatpush1.bf16.msra.mxu0 0
        %561 = vmatprep.subr.bf16.mxu0 0
        %562 = vmatpush1.bf16.msra.mxu0 0
        %563 = vmatprep.subr.bf16.mxu0 0
        %564 = vmatpush1.bf16.msra.mxu0 0
        %565 = vmatprep.subr.bf16.mxu0 0
        %566 = vmatpush1.bf16.msra.mxu0 0
        %567 = vmatprep.subr.bf16.mxu0 0
        %568 = vmatpush1.bf16.msra.mxu0 0
        %569 = vmatprep.subr.bf16.mxu0 0
        %570 = vmatpush1.bf16.msra.mxu0 0
        %571 = vmatprep.subr.bf16.mxu0 0
        %572 = vmatpush1.bf16.msra.mxu0 0
        %573 = vmatprep.subr.bf16.mxu0 0
        %574 = vmatpush1.bf16.msra.mxu0 0
        %575 = vmatprep.subr.bf16.mxu0 0
        %576 = vmatpush1.bf16.msra.mxu0 0
        %577 = vmatprep.subr.bf16.mxu0 0
        %578 = vmatpush1.bf16.msra.mxu0 0
        %579 = vmatprep.subr.bf16.mxu0 0
        %580 = vmatpush1.bf16.msra.mxu0 0
        %581 = vmatprep.subr.bf16.mxu0 0
        %582 = vmatpush1.bf16.msra.mxu0 0
        %583 = vmatprep.subr.bf16.mxu0 0
        %584 = vmatpush1.bf16.msra.mxu0 0
        %585 = vmatprep.subr.bf16.mxu0 0
        %586 = vmatpush1.bf16.msra.mxu0 0
        %587 = vmatprep.mubr.bf16.mxu0 0
        %588 = vmatmul.mubr.bf16.gmra.mrb[0].mxu0 %v549
        %v589 = vpop.f32.mrb[0].mxu0
        %v590 = vadd.f32 %v545, %v589
        %v591 = vpop.f32.mrb[0].mxu0
        %v592 = vpop.f32.mrb[0].mxu0
        %v593 = vadd.f32 %v545, %v592
        %v594 = vpop.f32.mrb[0].mxu0
        %595 = vdwg.mxu0
        %596 = vst [vmem:[%s298] sm:$0xff] %v590
        %597 = vst [vmem:[%s298 + $0x8] sm:$0xff] %v593
        %s598 = sand.u32 %s203, 1
        %s599 = scalar_lea.sflag [#allocation3], %s598
        %s600 = sand.u32 %s203, 1
        %s601 = smul.addr %s600, 16
        %s602 = scalar_lea.vmem [#allocation2], %s601
        // Predicated region
        $region53: #{tpu_custom_call.1} parent=51 // pred_check
          %p603 = pneg %p213
        $region54: #{tpu_custom_call.1} parent=51 // pred_check_branch
          %605 = sbr.rel (%p603) target = $region56
        $region55: #{tpu_custom_call.1} parent=51 // pred_region
          %s607 = ssub.s32 256, 256
          %608 = vsyncadd %s599, %s607
          %s609 = smul.addr %s22, 2
          %s610 = smul.addr %s609, 128
          %s611 = scalar_lea.hbm %s8, %s610
          %s612 = sshll.u32 %s602, 4
          %s613 = int_to_ptr.vmem [resolvable:$true] %s612
          %618 = dma.vmem_to_hbm [thread:$0]  %s613, 256, %s611, %s599, 128, 128, 8
        $region56: #{tpu_custom_call.1} parent=51 // pred_fallthru
          _
      $region52: #{tpu_custom_call.1} parent=5 // pred_fallthru
        _
      %p619 = scmp.le.s32.totalorder 2, %s17
      // Predicated region
      $region57: #{tpu_custom_call.1} parent=5 // pred_check
        %p620 = pneg %p619
      $region58: #{tpu_custom_call.1} parent=5 // pred_check_branch
        %622 = sbr.rel (%p620) target = $region60
      $region59: #{tpu_custom_call.1} parent=5 // pred_region
        %s623 = ssub.s32 %s17, 2
        // Predicated region
        $region61: #{tpu_custom_call.1} parent=59 // pred_check
          %p624 = pneg %p219
        $region62: #{tpu_custom_call.1} parent=59 // pred_check_branch
          %626 = sbr.rel (%p624) target = $region64
        $region63: #{tpu_custom_call.1} parent=59 // pred_region
          %s627 = sand.u32 %s204, 1
          %s628 = scalar_lea.sflag [#allocation3], %s627
          %s629 = sand.u32 %s204, 1
          %s630 = smul.addr %s629, 16
          %s631 = scalar_lea.vmem [#allocation2], %s630
          %632 = dma.done %s628, 256
        $region64: #{tpu_custom_call.1} parent=59 // pred_fallthru
          _
      $region60: #{tpu_custom_call.1} parent=5 // pred_fallthru
        _
    $region6: #{tpu_custom_call.1} parent=1 // loop_footer
      %s21 = sadd.s32 1, %s17
    $region7: #{tpu_custom_call.1} parent=1 // loop_footer_branch
      %16 = sbr.rel target = $region3
    $region8: #{tpu_custom_call.1} parent=1 // loop_exit
      _
    %633 = vsyncpa [#allocation3], 1
    %s634 = scalar_lea.sflag [#allocation3], 1
    %635 = vsyncpa %s634, 1

</llo_original>
